<compile_context>
chip_gen: v7x
topology: tpu7x:2x2x1
jax: 0.10.0
libtpu: 0.0.40
codegen_flags: <defaults>
</compile_context>

<pallas_src>
import jax
import jax.numpy as jnp
from jax.experimental import pallas as pl
from jax.experimental.pallas import tpu as pltpu


def make_fused_kernel(H, W):
    """Fused theta-head + cr_flow kernel (closure carries static H, W)."""
    HW = H * W

    def kernel(params_ref, fixed_ref, moving_ref, coords_ref, theta_ref, flow_ref):
        # params_ref: SMEM (18,)      [w00..w05, w10..w15, b0..b5]
        # fixed_ref:  VMEM (B, HW)    fixed image, flattened spatial (lane-dense)
        # moving_ref: VMEM (B, HW)    moving image, flattened spatial
        # coords_ref: VMEM (2, HW)    row 0 = xc (W-normalized), row 1 = yc
        # theta_ref:  VMEM (B, 8)     output: theta row-major in columns 0..5
        # flow_ref:   VMEM (B, 2*HW)  output: [gy*H/2 | gx*W/2] lane-concatenated
        m_fix = jnp.mean(fixed_ref[...], axis=-1, keepdims=True)    # (B, 1)
        m_mov = jnp.mean(moving_ref[...], axis=-1, keepdims=True)   # (B, 1)
        B = m_fix.shape[0]

        # Tiny linear head on the VPU: theta_k = m_fix*w[0,k] + m_mov*w[1,k] + b[k]
        th = []
        for k in range(6):
            col = (m_fix * params_ref[k]
                   + m_mov * params_ref[6 + k]
                   + params_ref[12 + k])                             # (B, 1)
            th.append(col)

        theta_ref[...] = jnp.concatenate(
            th + [jnp.zeros((B, 2), jnp.float32)], axis=-1)          # (B, 8)

        # cr_flow: F.affine_grid(theta - eye(2,3), align_corners=False),
        # then [1,0] channel swap, NCHW permute, * shape/2 -- fused below.
        t00 = th[0] - 1.0                                            # theta - eye(2,3)
        t01 = th[1]
        t02 = th[2]
        t10 = th[3]
        t11 = th[4] - 1.0
        t12 = th[5]

        xc = coords_ref[0:1, :]                                      # (1, HW)
        yc = coords_ref[1:2, :]                                      # (1, HW)

        gx = t00 * xc + t01 * yc + t02                               # (B, HW)
        gy = t10 * xc + t11 * yc + t12                               # (B, HW)

        # channel 0 = row (H-axis) displacement, channel 1 = col (W-axis);
        # single lane-dense unmasked store.
        flow_ref[...] = jnp.concatenate([gy * (H / 2.0), gx * (W / 2.0)], axis=-1)

    return kernel


class TSMAffineStemPallas:
    """Pallas implementation of TSMAffineStem.forward (2D case, dim=2)."""

    def __init__(self, im_size=16, in_channels=2, flow_multiplier=1.0,
                 key=jax.random.PRNGKey(0)):
        # TODO(synk): the full TransMorph-Affine Swin backbone (`tsm_a`) is an
        # external model with no compact Pallas equivalent here; it is replaced
        # by a deterministic GAP + linear affine head initialized near identity.
        self.H = self.W = im_size
        self.in_channels = in_channels
        # NOTE: mirrors the PyTorch module, whose forward() stores
        # flow_multiplier but never applies it to the flow or theta.
        self.flow_multiplier = flow_multiplier

        self.w6 = jax.random.normal(key, (in_channels, 6), jnp.float32) * 0.01
        self.b6 = jnp.array([1.0, 0.0, 0.0, 0.0, 1.0, 0.0], jnp.float32)
        # Flat scalar params for SMEM: [w row-major (in_channels*6), b (6)].
        self.params = jnp.concatenate([self.w6.reshape(-1), self.b6])

        # Precomputed normalized grid coords (align_corners=False), lane-dense.
        H, W = self.H, self.W
        idx = jnp.arange(H * W, dtype=jnp.int32)
        col = (idx % W).astype(jnp.float32)
        row = (idx // W).astype(jnp.float32)
        xc = (2.0 * col + 1.0) / W - 1.0
        yc = (2.0 * row + 1.0) / H - 1.0
        self.coords = jnp.stack([xc, yc], axis=0)                     # (2, HW)

    def __call__(self, fixed, moving):
        B = fixed.shape[0]
        H, W = self.H, self.W
        HW = H * W
        fixed_flat = fixed.reshape(B, HW)     # (B,1,H,W) -> (B,HW), free reshape
        moving_flat = moving.reshape(B, HW)

        kernel = make_fused_kernel(H, W)
        cost = pl.CostEstimate(
            flops=10 * B * HW + 20 * B,
            transcendentals=0,
            bytes_accessed=4 * (2 * B * HW + 2 * HW + 18 + 2 * B * HW + 8 * B),
        )
        theta8, flow_flat = pl.pallas_call(
            kernel,
            out_shape=(
                jax.ShapeDtypeStruct((B, 8), jnp.float32),        # theta (padded)
                jax.ShapeDtypeStruct((B, 2 * HW), jnp.float32),   # flow (flat)
            ),
            in_specs=[
                pl.BlockSpec(memory_space=pltpu.MemorySpace.SMEM),   # params
                pl.BlockSpec(memory_space=pltpu.MemorySpace.VMEM),   # fixed
                pl.BlockSpec(memory_space=pltpu.MemorySpace.VMEM),   # moving
                pl.BlockSpec(memory_space=pltpu.MemorySpace.VMEM),   # coords
            ],
            out_specs=(
                pl.BlockSpec(memory_space=pltpu.MemorySpace.VMEM),
                pl.BlockSpec(memory_space=pltpu.MemorySpace.VMEM),
            ),
            cost_estimate=cost,
        )(self.params, fixed_flat, moving_flat, self.coords)

        flow = flow_flat.reshape(B, 2, H, W)            # free layout plumbing
        theta = theta8[:, :6].reshape(B, 2, 3)
        return flow, {"theta": theta}


def _reference_flow(theta, H, W):
    """Pure-JAX reference of cr_flow (2D, align_corners=False)."""
    tp = theta - jnp.eye(2, 3, dtype=theta.dtype)[None]
    xs = (2.0 * jnp.arange(W, dtype=jnp.float32) + 1.0) / W - 1.0
    ys = (2.0 * jnp.arange(H, dtype=jnp.float32) + 1.0) / H - 1.0
    xc, yc = jnp.meshgrid(xs, ys)                        # (H, W) each
    gx = (tp[:, 0, 0, None, None] * xc + tp[:, 0, 1, None, None] * yc
          + tp[:, 0, 2, None, None])
    gy = (tp[:, 1, 0, None, None] * xc + tp[:, 1, 1, None, None] * yc
          + tp[:, 1, 2, None, None])
    return jnp.stack([gy * (H / 2.0), gx * (W / 2.0)], axis=1)


if __name__ == "__main__":
    B, H, W = 2, 16, 16
    key = jax.random.PRNGKey(0)
    k_fix, k_mov, k_params = jax.random.split(key, 3)
    fixed = jax.random.normal(k_fix, (B, 1, H, W), jnp.float32)
    moving = jax.random.normal(k_mov, (B, 1, H, W), jnp.float32)

    model = TSMAffineStemPallas(im_size=H, in_channels=2, key=k_params)
    flow, aux = model(fixed, moving)
    flow = jax.block_until_ready(flow)
    theta = jax.block_until_ready(aux["theta"])

    # Correctness check against pure-JAX reference of the forward math.
    concat = jnp.concatenate([fixed, moving], axis=1)
    mean = jnp.mean(concat, axis=(2, 3))                              # (B, 2)
    theta_ref = (mean @ model.w6 + model.b6[None, :]).reshape(B, 2, 3)
    flow_ref = _reference_flow(theta_ref, H, W)

    assert flow.shape == (B, 2, H, W)
    assert theta.shape == (B, 2, 3)
    assert jnp.allclose(theta, theta_ref, atol=1e-5, rtol=1e-5)
    assert jnp.allclose(flow, flow_ref, atol=1e-5, rtol=1e-5)
    print("KERNEL_OK")
</pallas_src>

<mosaic_0001>
module attributes {stable_mosaic.version = 11 : i64} {
  func.func @kernel(%arg0: memref<18xf32, #tpu.memory_space<smem>>, %arg1: memref<2x256xf32, #tpu.memory_space<vmem>>, %arg2: memref<2x256xf32, #tpu.memory_space<vmem>>, %arg3: memref<2x256xf32, #tpu.memory_space<vmem>>, %arg4: memref<2x8xf32, #tpu.memory_space<vmem>>, %arg5: memref<2x512xf32, #tpu.memory_space<vmem>>) attributes {dimension_semantics = [], scalar_prefetch = 0 : i64, scratch_operands = 0 : i64, tpu.core_type = #tpu.core_type<tc>} {
    %c0 = arith.constant 0 : index
    %c0_0 = arith.constant 0 : index
    %0 = vector.load %arg1[%c0, %c0_0] : memref<2x256xf32, #tpu.memory_space<vmem>>, vector<2x256xf32>
    %cst = arith.constant dense<0.000000e+00> : vector<2xf32>
    %1 = vector.multi_reduction <add>, %0, %cst [1] : vector<2x256xf32> to vector<2xf32>
    %2 = vector.shape_cast %1 : vector<2xf32> to vector<2x1xf32>
    %cst_1 = arith.constant 2.560000e+02 : f32
    %3 = vector.broadcast %cst_1 : f32 to vector<2x1xf32>
    %4 = arith.divf %2, %3 : vector<2x1xf32>
    %c0_2 = arith.constant 0 : index
    %c0_3 = arith.constant 0 : index
    %5 = vector.load %arg2[%c0_2, %c0_3] : memref<2x256xf32, #tpu.memory_space<vmem>>, vector<2x256xf32>
    %cst_4 = arith.constant dense<0.000000e+00> : vector<2xf32>
    %6 = vector.multi_reduction <add>, %5, %cst_4 [1] : vector<2x256xf32> to vector<2xf32>
    %7 = vector.shape_cast %6 : vector<2xf32> to vector<2x1xf32>
    %cst_5 = arith.constant 2.560000e+02 : f32
    %8 = vector.broadcast %cst_5 : f32 to vector<2x1xf32>
    %9 = arith.divf %7, %8 : vector<2x1xf32>
    %c0_6 = arith.constant 0 : index
    %10 = memref.load %arg0[%c0_6] : memref<18xf32, #tpu.memory_space<smem>>
    %11 = vector.broadcast %10 : f32 to vector<2x1xf32>
    %12 = arith.mulf %4, %11 : vector<2x1xf32>
    %c6 = arith.constant 6 : index
    %13 = memref.load %arg0[%c6] : memref<18xf32, #tpu.memory_space<smem>>
    %14 = vector.broadcast %13 : f32 to vector<2x1xf32>
    %15 = arith.mulf %9, %14 : vector<2x1xf32>
    %16 = arith.addf %12, %15 : vector<2x1xf32>
    %c12 = arith.constant 12 : index
    %17 = memref.load %arg0[%c12] : memref<18xf32, #tpu.memory_space<smem>>
    %18 = vector.broadcast %17 : f32 to vector<2x1xf32>
    %19 = arith.addf %16, %18 : vector<2x1xf32>
    %c1 = arith.constant 1 : index
    %20 = memref.load %arg0[%c1] : memref<18xf32, #tpu.memory_space<smem>>
    %21 = vector.broadcast %20 : f32 to vector<2x1xf32>
    %22 = arith.mulf %4, %21 : vector<2x1xf32>
    %c7 = arith.constant 7 : index
    %23 = memref.load %arg0[%c7] : memref<18xf32, #tpu.memory_space<smem>>
    %24 = vector.broadcast %23 : f32 to vector<2x1xf32>
    %25 = arith.mulf %9, %24 : vector<2x1xf32>
    %26 = arith.addf %22, %25 : vector<2x1xf32>
    %c13 = arith.constant 13 : index
    %27 = memref.load %arg0[%c13] : memref<18xf32, #tpu.memory_space<smem>>
    %28 = vector.broadcast %27 : f32 to vector<2x1xf32>
    %29 = arith.addf %26, %28 : vector<2x1xf32>
    %c2 = arith.constant 2 : index
    %30 = memref.load %arg0[%c2] : memref<18xf32, #tpu.memory_space<smem>>
    %31 = vector.broadcast %30 : f32 to vector<2x1xf32>
    %32 = arith.mulf %4, %31 : vector<2x1xf32>
    %c8 = arith.constant 8 : index
    %33 = memref.load %arg0[%c8] : memref<18xf32, #tpu.memory_space<smem>>
    %34 = vector.broadcast %33 : f32 to vector<2x1xf32>
    %35 = arith.mulf %9, %34 : vector<2x1xf32>
    %36 = arith.addf %32, %35 : vector<2x1xf32>
    %c14 = arith.constant 14 : index
    %37 = memref.load %arg0[%c14] : memref<18xf32, #tpu.memory_space<smem>>
    %38 = vector.broadcast %37 : f32 to vector<2x1xf32>
    %39 = arith.addf %36, %38 : vector<2x1xf32>
    %c3 = arith.constant 3 : index
    %40 = memref.load %arg0[%c3] : memref<18xf32, #tpu.memory_space<smem>>
    %41 = vector.broadcast %40 : f32 to vector<2x1xf32>
    %42 = arith.mulf %4, %41 : vector<2x1xf32>
    %c9 = arith.constant 9 : index
    %43 = memref.load %arg0[%c9] : memref<18xf32, #tpu.memory_space<smem>>
    %44 = vector.broadcast %43 : f32 to vector<2x1xf32>
    %45 = arith.mulf %9, %44 : vector<2x1xf32>
    %46 = arith.addf %42, %45 : vector<2x1xf32>
    %c15 = arith.constant 15 : index
    %47 = memref.load %arg0[%c15] : memref<18xf32, #tpu.memory_space<smem>>
    %48 = vector.broadcast %47 : f32 to vector<2x1xf32>
    %49 = arith.addf %46, %48 : vector<2x1xf32>
    %c4 = arith.constant 4 : index
    %50 = memref.load %arg0[%c4] : memref<18xf32, #tpu.memory_space<smem>>
    %51 = vector.broadcast %50 : f32 to vector<2x1xf32>
    %52 = arith.mulf %4, %51 : vector<2x1xf32>
    %c10 = arith.constant 10 : index
    %53 = memref.load %arg0[%c10] : memref<18xf32, #tpu.memory_space<smem>>
    %54 = vector.broadcast %53 : f32 to vector<2x1xf32>
    %55 = arith.mulf %9, %54 : vector<2x1xf32>
    %56 = arith.addf %52, %55 : vector<2x1xf32>
    %c16 = arith.constant 16 : index
    %57 = memref.load %arg0[%c16] : memref<18xf32, #tpu.memory_space<smem>>
    %58 = vector.broadcast %57 : f32 to vector<2x1xf32>
    %59 = arith.addf %56, %58 : vector<2x1xf32>
    %c5 = arith.constant 5 : index
    %60 = memref.load %arg0[%c5] : memref<18xf32, #tpu.memory_space<smem>>
    %61 = vector.broadcast %60 : f32 to vector<2x1xf32>
    %62 = arith.mulf %4, %61 : vector<2x1xf32>
    %c11 = arith.constant 11 : index
    %63 = memref.load %arg0[%c11] : memref<18xf32, #tpu.memory_space<smem>>
    %64 = vector.broadcast %63 : f32 to vector<2x1xf32>
    %65 = arith.mulf %9, %64 : vector<2x1xf32>
    %66 = arith.addf %62, %65 : vector<2x1xf32>
    %c17 = arith.constant 17 : index
    %67 = memref.load %arg0[%c17] : memref<18xf32, #tpu.memory_space<smem>>
    %68 = vector.broadcast %67 : f32 to vector<2x1xf32>
    %69 = arith.addf %66, %68 : vector<2x1xf32>
    %cst_7 = arith.constant 0.000000e+00 : f32
    %70 = vector.broadcast %cst_7 : f32 to vector<2x2xf32>
    %71 = tpu.concatenate %19, %29, %39, %49, %59, %69, %70 in 1 : vector<2x1xf32>, vector<2x1xf32>, vector<2x1xf32>, vector<2x1xf32>, vector<2x1xf32>, vector<2x1xf32>, vector<2x2xf32> -> vector<2x8xf32>
    %c0_8 = arith.constant 0 : index
    %c0_9 = arith.constant 0 : index
    %72 = vector.load %arg4[%c0_8, %c0_9] : memref<2x8xf32, #tpu.memory_space<vmem>>, vector<2x8xf32>
    tpu.vector_store %arg4[%c0_8, %c0_9], %71 {strides = array<i32>} : memref<2x8xf32, #tpu.memory_space<vmem>>, vector<2x8xf32>,
    %cst_10 = arith.constant 1.000000e+00 : f32
    %73 = vector.broadcast %cst_10 : f32 to vector<2x1xf32>
    %74 = arith.subf %19, %73 : vector<2x1xf32>
    %cst_11 = arith.constant 1.000000e+00 : f32
    %75 = vector.broadcast %cst_11 : f32 to vector<2x1xf32>
    %76 = arith.subf %59, %75 : vector<2x1xf32>
    %c0_12 = arith.constant 0 : index
    %c0_13 = arith.constant 0 : index
    %77 = vector.load %arg3[%c0_12, %c0_13] : memref<2x256xf32, #tpu.memory_space<vmem>>, vector<1x256xf32>
    %c1_14 = arith.constant 1 : index
    %c0_15 = arith.constant 0 : index
    %78 = vector.load %arg3[%c1_14, %c0_15] : memref<2x256xf32, #tpu.memory_space<vmem>>, vector<1x256xf32>
    %79 = vector.broadcast %74 : vector<2x1xf32> to vector<2x256xf32>
    %80 = vector.broadcast %77 : vector<1x256xf32> to vector<2x256xf32>
    %81 = arith.mulf %79, %80 : vector<2x256xf32>
    %82 = vector.broadcast %29 : vector<2x1xf32> to vector<2x256xf32>
    %83 = vector.broadcast %78 : vector<1x256xf32> to vector<2x256xf32>
    %84 = arith.mulf %82, %83 : vector<2x256xf32>
    %85 = arith.addf %81, %84 : vector<2x256xf32>
    %86 = vector.broadcast %39 : vector<2x1xf32> to vector<2x256xf32>
    %87 = arith.addf %85, %86 : vector<2x256xf32>
    %88 = vector.broadcast %49 : vector<2x1xf32> to vector<2x256xf32>
    %89 = vector.broadcast %77 : vector<1x256xf32> to vector<2x256xf32>
    %90 = arith.mulf %88, %89 : vector<2x256xf32>
    %91 = vector.broadcast %76 : vector<2x1xf32> to vector<2x256xf32>
    %92 = vector.broadcast %78 : vector<1x256xf32> to vector<2x256xf32>
    %93 = arith.mulf %91, %92 : vector<2x256xf32>
    %94 = arith.addf %90, %93 : vector<2x256xf32>
    %95 = vector.broadcast %69 : vector<2x1xf32> to vector<2x256xf32>
    %96 = arith.addf %94, %95 : vector<2x256xf32>
    %cst_16 = arith.constant 8.000000e+00 : f32
    %97 = vector.broadcast %cst_16 : f32 to vector<2x256xf32>
    %98 = arith.mulf %96, %97 : vector<2x256xf32>
    %cst_17 = arith.constant 8.000000e+00 : f32
    %99 = vector.broadcast %cst_17 : f32 to vector<2x256xf32>
    %100 = arith.mulf %87, %99 : vector<2x256xf32>
    %101 = tpu.concatenate %98, %100 in 1 : vector<2x256xf32>, vector<2x256xf32> -> vector<2x512xf32>
    %c0_18 = arith.constant 0 : index
    %c0_19 = arith.constant 0 : index
    %102 = vector.load %arg5[%c0_18, %c0_19] : memref<2x512xf32, #tpu.memory_space<vmem>>, vector<2x512xf32>
    tpu.vector_store %arg5[%c0_18, %c0_19], %101 {strides = array<i32>} : memref<2x512xf32, #tpu.memory_space<vmem>>, vector<2x512xf32>,
    return
  }
}

</mosaic_0001>

<llo_original>
// kernel: tpu_custom_call.1
$region0: #{tpu_custom_call.1}
  #allocation0 [shape = 'u32[]', space=smem, size = 0x4, offset = 0x4, fixed_abs, tag = 'smem constant byte address 0x4 - core index']
  #allocation1 [shape = 'u32[144,128]{1,0:T(1,128)}', space=vmem, size = 0x12000, scoped, tag = 'internal scratch']
  %s0 = inlined_call_operand.hbm [shape: f32[18], index: 0, kind: input, shape index: {}]
  %s1 = inlined_call_operand.hbm [shape: f32[2,256], index: 1, kind: input, shape index: {}]
  %s2 = inlined_call_operand.vmem [shape: f32[2,256], index: 2, kind: input, shape index: {}]
  %s3 = inlined_call_operand.vmem [shape: f32[2,256], index: 3, kind: input, shape index: {}]
  %s4 = inlined_call_operand.hbm [shape: f32[2,8], index: 4, kind: output, shape index: {0}]
  %s5 = inlined_call_operand.hbm [shape: f32[2,512], index: 5, kind: output, shape index: {1}]
  %6 = xla_tuple %s4, %s5
  %s7 = sld [smem:[#allocation0]]
  $region42: #{tpu_custom_call.1} parent=0
    _
  %s9 = ssub.s32 1, %s7
  %s10 = scalar_select 0, %s9, %s7
  $region1: #{tpu_custom_call.1} parent=0
    #allocation2 [shape = 'u8[512]{0}', space=smem, size = 0x200, scoped, tag = 'input window, operand 0, single buffered']
    #allocation3 [shape = 's32[1]{0}', space=sflag, size = 0x4, scoped, tag = 'scoped memory for tpu_custom_call.1']
    #allocation4 [shape = 's32[1]{0}', space=sflag, size = 0x4, scoped, tag = 'scoped memory for tpu_custom_call.1']
    #allocation5 [shape = 's32[1]{0}', space=sflag, size = 0x4, scoped, tag = 'scoped memory for tpu_custom_call.1']
    #allocation6 [shape = 'u8[2048]{0}', space=vmem, size = 0x800, scoped, tag = 'input window, operand 1, single buffered']
    #allocation7 [shape = 'u8[1024]{0}', space=vmem, size = 0x400, scoped, tag = 'output window, operand 0, single buffered']
    #allocation8 [shape = 'u8[4096]{0}', space=vmem, size = 0x1000, scoped, tag = 'output window, operand 1, single buffered']
    #allocation9 [shape = 's32[1]{0}', space=sflag, size = 0x4, scoped, tag = 'scoped memory for tpu_custom_call.1']
    %11 = vsyncpa [#allocation5], 0
    %12 = vsyncpa [#allocation3], 0
    %13 = vsyncpa [#allocation4], 0
    %14 = vsyncpa [#allocation9], 0
    // Predicated region
    $region2: #{tpu_custom_call.1} parent=1 // pred_check
      _
    $region3: #{tpu_custom_call.1} parent=1 // pred_check_branch
      %16 = sbr.rel (0) target = $region5
    $region4: #{tpu_custom_call.1} parent=1 // pred_region
      %s18 = ssub.s32 16, 16
      %19 = vsyncadd [#allocation5], %s18
      %22 = dma.hbm_to_smem %s0, 16, [#allocation2], [#allocation5]
    $region5: #{tpu_custom_call.1} parent=1 // pred_fallthru
      _
    // Predicated region
    $region6: #{tpu_custom_call.1} parent=1 // pred_check
      _
    $region7: #{tpu_custom_call.1} parent=1 // pred_check_branch
      %24 = sbr.rel (0) target = $region9
    $region8: #{tpu_custom_call.1} parent=1 // pred_region
      %s26 = ssub.s32 64, 64
      %27 = vsyncadd [#allocation3], %s26
      %s29 = sshll.u32 [#allocation6], 4
      %s30 = int_to_ptr.vmem [resolvable:$true] %s29
      %32 = dma.hbm_to_vmem [thread:$0]  %s1, 64, %s30, [#allocation3]
    $region9: #{tpu_custom_call.1} parent=1 // pred_fallthru
      _
    // Predicated region
    $region10: #{tpu_custom_call.1} parent=1 // pred_check
      _
    $region11: #{tpu_custom_call.1} parent=1 // pred_check_branch
      %34 = sbr.rel (0) target = $region13
    $region12: #{tpu_custom_call.1} parent=1 // pred_region
      _
    $region13: #{tpu_custom_call.1} parent=1 // pred_fallthru
      _
    // Predicated region
    $region14: #{tpu_custom_call.1} parent=1 // pred_check
      _
    $region15: #{tpu_custom_call.1} parent=1 // pred_check_branch
      %36 = sbr.rel (0) target = $region17
    $region16: #{tpu_custom_call.1} parent=1 // pred_region
      _
    $region17: #{tpu_custom_call.1} parent=1 // pred_fallthru
      _
    // Predicated region
    $region18: #{tpu_custom_call.1} parent=1 // pred_check
      _
    $region19: #{tpu_custom_call.1} parent=1 // pred_check_branch
      %38 = sbr.rel (0) target = $region21
    $region20: #{tpu_custom_call.1} parent=1 // pred_region
      %39 = dma.done [#allocation5], 16
    $region21: #{tpu_custom_call.1} parent=1 // pred_fallthru
      _
    // Predicated region
    $region22: #{tpu_custom_call.1} parent=1 // pred_check
      _
    $region23: #{tpu_custom_call.1} parent=1 // pred_check_branch
      %41 = sbr.rel (0) target = $region25
    $region24: #{tpu_custom_call.1} parent=1 // pred_region
      %42 = dma.done [#allocation3], 64
    $region25: #{tpu_custom_call.1} parent=1 // pred_fallthru
      _
    %43 = sfence
    %v44 = vld [vmem:[#allocation6] sm:$0xf]
    %v47 = vunpack.c.l.s4 1983009808
    %v48 = vunpack.c.0.s8 %v47
    %v49 = vlaneseq
    %v50 = vshrl.u32 %v49, 7
    %v51 = vsub.s32 %v48, %v50
    %v52 = vrot.slane %v44, %v51
    %v53 = vcombine.high %v52, %v52
    %vm56 = vcmask 1041408
    %v57 = vsel %vm56, %v52, 0.0
    %v58 = vsel %vm56, %v53, 0.0
    %v59 = vadd.f32 %v57, %v58
    %60 = vadd.xlane.f32.xlu0 %v59
    %v61 = vpop.xlane.xlu0 %60
    %v62 = vrcp.pop 256.0
    %v63 = vmul.f32 %v61, %v62
    %v64 = vld [vmem:[%s2] sm:$0xf]
    %v67 = vunpack.c.l.s4 1983009808
    %v68 = vunpack.c.0.s8 %v67
    %v69 = vlaneseq
    %v70 = vshrl.u32 %v69, 7
    %v71 = vsub.s32 %v68, %v70
    %v72 = vrot.slane %v64, %v71
    %v73 = vcombine.high %v72, %v72
    %v76 = vsel %vm56, %v72, 0.0
    %v77 = vsel %vm56, %v73, 0.0
    %v78 = vadd.f32 %v76, %v77
    %79 = vadd.xlane.f32.xlu0 %v78
    %v80 = vpop.xlane.xlu0 %79
    %v81 = vmul.f32 %v80, %v62
    %s82 = sld [smem:[#allocation2]]
    %v83 = vstv %s82
    %v84 = vmul.f32 %v63, %v83
    %s85 = sld [smem:[#allocation2 + $0x6]]
    %v86 = vstv %s85
    %v87 = vmul.f32 %v81, %v86
    %v88 = vadd.f32 %v84, %v87
    %s89 = sld [smem:[#allocation2 + $0xc]]
    %v90 = vstv %s89
    %v91 = vadd.f32 %v88, %v90
    %s92 = sld [smem:[#allocation2 + $0x1]]
    %v93 = vstv %s92
    %v94 = vmul.f32 %v63, %v93
    %s95 = sld [smem:[#allocation2 + $0x7]]
    %v96 = vstv %s95
    %v97 = vmul.f32 %v81, %v96
    %v98 = vadd.f32 %v94, %v97
    %s99 = sld [smem:[#allocation2 + $0xd]]
    %v100 = vstv %s99
    %v101 = vadd.f32 %v98, %v100
    %s102 = sld [smem:[#allocation2 + $0x2]]
    %v103 = vstv %s102
    %v104 = vmul.f32 %v63, %v103
    %s105 = sld [smem:[#allocation2 + $0x8]]
    %v106 = vstv %s105
    %v107 = vmul.f32 %v81, %v106
    %v108 = vadd.f32 %v104, %v107
    %s109 = sld [smem:[#allocation2 + $0xe]]
    %v110 = vstv %s109
    %v111 = vadd.f32 %v108, %v110
    %s112 = sld [smem:[#allocation2 + $0x3]]
    %v113 = vstv %s112
    %v114 = vmul.f32 %v63, %v113
    %s115 = sld [smem:[#allocation2 + $0x9]]
    %v116 = vstv %s115
    %v117 = vmul.f32 %v81, %v116
    %v118 = vadd.f32 %v114, %v117
    %s119 = sld [smem:[#allocation2 + $0xf]]
    %v120 = vstv %s119
    %v121 = vadd.f32 %v118, %v120
    %s122 = sld [smem:[#allocation2 + $0x4]]
    %v123 = vstv %s122
    %v124 = vmul.f32 %v63, %v123
    %s125 = sld [smem:[#allocation2 + $0xa]]
    %v126 = vstv %s125
    %v127 = vmul.f32 %v81, %v126
    %v128 = vadd.f32 %v124, %v127
    %s129 = sld [smem:[#allocation2 + $0x10]]
    %v130 = vstv %s129
    %v131 = vadd.f32 %v128, %v130
    %s132 = sld [smem:[#allocation2 + $0x5]]
    %v133 = vstv %s132
    %v134 = vmul.f32 %v63, %v133
    %s135 = sld [smem:[#allocation2 + $0xb]]
    %v136 = vstv %s135
    %v137 = vmul.f32 %v81, %v136
    %v138 = vadd.f32 %v134, %v137
    %s139 = sld [smem:[#allocation2 + $0x11]]
    %v140 = vstv %s139
    %v141 = vadd.f32 %v138, %v140
    %vm142 = vcmask 7168
    %v143 = vsel %vm142, %v91, %v101
    %vm144 = vcmask 15360
    %v145 = vsel %vm144, %v143, %v111
    %vm146 = vcmask 23552
    %v147 = vsel %vm146, %v145, %v121
    %vm148 = vcmask 31744
    %v149 = vsel %vm148, %v147, %v131
    %vm150 = vcmask 39936
    %v151 = vsel %vm150, %v149, %v141
    %vm152 = vcmask 48128
    %v153 = vsel %vm152, %v151, 0.0
    %vm154 = vcmask 58368
    %155 = vst.msk [vmem:[#allocation7] sm:$0x3] %vm154, %v153
    %v156 = vsub.f32 %v91, 1.0
    %v157 = vsub.f32 %v131, 1.0
    %v158 = vld [vmem:[%s3] ss:$2 sm:$0x3]
    %s159 = scalar_lea.vmem %s3, 1
    %v160 = vld [vmem:[%s159] ss:$2 sm:$0x3]
    %v162 = vlaneseq
    %v163 = vshrl.u32 %v162, 7
    %v164 = vsub.s32 0, %v163
    %v165 = vrot.slane %v158, %v164
    %v166 = vlaneseq
    %v167 = vshrl.u32 %v166, 7
    %v168 = vsub.s32 1, %v167
    %v169 = vrot.slane %v158, %v168
    %v172 = vmul.f32 %v156, %v165
    %v173 = vmul.f32 %v156, %v169
    %v175 = vlaneseq
    %v176 = vshrl.u32 %v175, 7
    %v177 = vsub.s32 0, %v176
    %v178 = vrot.slane %v160, %v177
    %v179 = vlaneseq
    %v180 = vshrl.u32 %v179, 7
    %v181 = vsub.s32 1, %v180
    %v182 = vrot.slane %v160, %v181
    %v185 = vmul.f32 %v101, %v178
    %v186 = vmul.f32 %v101, %v182
    %v187 = vadd.f32 %v172, %v185
    %v188 = vadd.f32 %v173, %v186
    %v189 = vadd.f32 %v187, %v111
    %v190 = vadd.f32 %v188, %v111
    %v191 = vmul.f32 %v121, %v165
    %v192 = vmul.f32 %v121, %v169
    %v193 = vmul.f32 %v157, %v178
    %v194 = vmul.f32 %v157, %v182
    %v195 = vadd.f32 %v191, %v193
    %v196 = vadd.f32 %v192, %v194
    %v197 = vadd.f32 %v195, %v141
    %v198 = vadd.f32 %v196, %v141
    %v199 = vmul.f32 %v197, 8.0
    %v200 = vmul.f32 %v198, 8.0
    %v201 = vmul.f32 %v189, 8.0
    %v202 = vmul.f32 %v190, 8.0
    %v207 = vcombine.low %v199, %v200
    %v208 = vcombine.low %v201, %v202
    %v210 = vunpack.c.l.s4 1983009808
    %v211 = vunpack.c.0.s8 %v210
    %v212 = vlaneseq
    %v213 = vshrl.u32 %v212, 7
    %v214 = vsub.s32 %v211, %v213
    %v215 = vrot.slane %v207, %v214
    %v217 = vunpack.c.l.s4 1983009808
    %v218 = vunpack.c.0.s8 %v217
    %v219 = vlaneseq
    %v220 = vshrl.u32 %v219, 7
    %v221 = vsub.s32 %v218, %v220
    %v222 = vrot.slane %v208, %v221
    %v223 = vcombine.low %v215, %v222
    %225 = vst [vmem:[#allocation8] sm:$0xff] %v223
    // Predicated region
    $region26: #{tpu_custom_call.1} parent=1 // pred_check
      _
    $region27: #{tpu_custom_call.1} parent=1 // pred_check_branch
      %227 = sbr.rel (0) target = $region29
    $region28: #{tpu_custom_call.1} parent=1 // pred_region
      %s229 = ssub.s32 32, 32
      %230 = vsyncadd [#allocation4], %s229
      %s232 = sshll.u32 [#allocation7], 4
      %s233 = int_to_ptr.vmem [resolvable:$true] %s232
      %235 = dma.vmem_to_hbm [thread:$0]  %s233, 32, %s4, [#allocation4]
    $region29: #{tpu_custom_call.1} parent=1 // pred_fallthru
      _
    // Predicated region
    $region30: #{tpu_custom_call.1} parent=1 // pred_check
      _
    $region31: #{tpu_custom_call.1} parent=1 // pred_check_branch
      %237 = sbr.rel (0) target = $region33
    $region32: #{tpu_custom_call.1} parent=1 // pred_region
      %s239 = ssub.s32 128, 128
      %240 = vsyncadd [#allocation9], %s239
      %s242 = sshll.u32 [#allocation8], 4
      %s243 = int_to_ptr.vmem [resolvable:$true] %s242
      %245 = dma.vmem_to_hbm [thread:$0]  %s243, 128, %s5, [#allocation9]
    $region33: #{tpu_custom_call.1} parent=1 // pred_fallthru
      _
    // Predicated region
    $region34: #{tpu_custom_call.1} parent=1 // pred_check
      _
    $region35: #{tpu_custom_call.1} parent=1 // pred_check_branch
      %247 = sbr.rel (0) target = $region37
    $region36: #{tpu_custom_call.1} parent=1 // pred_region
      %248 = dma.done [#allocation4], 32
    $region37: #{tpu_custom_call.1} parent=1 // pred_fallthru
      _
    // Predicated region
    $region38: #{tpu_custom_call.1} parent=1 // pred_check
      _
    $region39: #{tpu_custom_call.1} parent=1 // pred_check_branch
      %250 = sbr.rel (0) target = $region41
    $region40: #{tpu_custom_call.1} parent=1 // pred_region
      %251 = dma.done [#allocation9], 128
    $region41: #{tpu_custom_call.1} parent=1 // pred_fallthru
      _
    %252 = vsyncpa [#allocation3], 1
    %253 = vsyncpa [#allocation4], 1
    %254 = vsyncpa [#allocation9], 1
    %255 = vsyncpa [#allocation5], 1

</llo_original>
